<compile_context>
chip_gen: v7x
topology: tpu7x:2x2x1
jax: 0.10.0
libtpu: 0.0.40
codegen_flags: <defaults>
</compile_context>

<pallas_src>
import functools

import jax
import jax.numpy as jnp
from jax import lax
from jax.experimental import pallas as pl
from jax.experimental.pallas import tpu as pltpu


LN_EPS = 1e-5  # PyTorch nn.LayerNorm default


def _round_up(x, m):
    return (x + m - 1) // m * m


def _layernorm_noaffine(x, n_real):
    """One-pass, affine-free LayerNorm over the last axis in f32.

    `n_real` is the logical width.  If x is lane-padded wider than n_real the
    padded columns MUST be exactly zero (guaranteed here: zero-padded weight
    columns + zero-padded bias followed by ReLU), so sum / sum-of-squares over
    the full width equal the sums over the real columns and dividing by
    n_real reproduces an unpadded LayerNorm exactly.
    """
    inv_n = 1.0 / n_real
    s = jnp.sum(x, axis=-1, keepdims=True)
    sq = jnp.sum(x * x, axis=-1, keepdims=True)
    mean = s * inv_n
    var = sq * inv_n - mean * mean            # biased variance, like torch
    return (x - mean) * lax.rsqrt(var + LN_EPS)


def transformer_output_kernel(
    x_ref,
    w1_ref, b1_ref,
    w2_ref, b2_ref,
    w3_ref, b3_ref,
    w4_ref, b4_ref,
    out_ref,
    *, d1, d2_real, d3,
):
    x = x_ref[...]  # already bf16

    # stage 1: Linear(H -> 128) + ReLU + LayerNorm(128)  (affine folded into w2/b2)
    h = jnp.dot(x, w1_ref[...], preferred_element_type=jnp.float32) + b1_ref[...]
    h = jnp.maximum(h, 0.0)
    h = _layernorm_noaffine(h, d1)

    # stage 2: Linear(128 -> 64, lane-padded to 128) + ReLU + LayerNorm(64)
    # (padded columns are structurally zero; LN affine folded into w3/b3)
    h = jnp.dot(h.astype(jnp.bfloat16), w2_ref[...],
                preferred_element_type=jnp.float32) + b2_ref[...]
    h = jnp.maximum(h, 0.0)
    h = _layernorm_noaffine(h, d2_real)

    # stage 3: Linear(64(pad 128) -> I) + ReLU + LayerNorm(I)
    # (padded w3 rows are zero, so the non-zero padded LN2 columns contribute
    #  nothing; LN affine folded into w4/b4)
    h = jnp.dot(h.astype(jnp.bfloat16), w3_ref[...],
                preferred_element_type=jnp.float32) + b3_ref[...]
    h = jnp.maximum(h, 0.0)
    h = _layernorm_noaffine(h, d3)

    # stage 4: Linear(I -> I) + ReLU
    h = jnp.dot(h.astype(jnp.bfloat16), w4_ref[...],
                preferred_element_type=jnp.float32) + b4_ref[...]
    h = jnp.maximum(h, 0.0)

    out_ref[...] = h.astype(out_ref.dtype)


def transformer_output(hidden_states, params, *, row_tile=512,
                       out_dtype=jnp.bfloat16):
    """hidden_states: (B, S, H). Returns (B, S, intermediate_size) in out_dtype.

    Note: matmul operands are bf16 (f32 MXU accumulation) and the default
    output dtype is bf16; this is not bit-parity with f32 torch but matches
    the bf16 reference within tolerance.
    """
    B, S, H = hidden_states.shape
    rows = B * S
    I = params["w4"].shape[1]

    # Clamp the row tile: >=8 (sublane), no bigger than needed, and aim for
    # >=4 grid steps (>=2 per TensorCore on v7x megacore) so the pipeline can
    # overlap DMA with compute.
    row_tile = max(8, min(row_tile, _round_up(pl.cdiv(rows, 4), 8)))
    rows_p = _round_up(rows, row_tile)

    # bf16 activations in (lossless: only ever used as a bf16 MXU operand).
    x2d = hidden_states.reshape(rows, H).astype(jnp.bfloat16)
    if rows_p != rows:
        x2d = jnp.pad(x2d, ((0, rows_p - rows), (0, 0)))

    # ---- Fold each LayerNorm's gamma/beta into the following Linear --------
    #   (g*z + be) @ W + b == z @ (g[:,None]*W) + (be @ W + b)
    g1, be1 = params["g1"][0], params["be1"][0]   # (128,)
    g2, be2 = params["g2"][0], params["be2"][0]   # (64,)
    g3, be3 = params["g3"][0], params["be3"][0]   # (I,)

    w1f = params["w1"]
    b1f = params["b1"]
    w2f = g1[:, None] * params["w2"]
    b2f = params["b2"] + be1 @ params["w2"]
    w3f = g2[:, None] * params["w3"]
    b3f = params["b3"] + be2 @ params["w3"]
    w4f = g3[:, None] * params["w4"]
    b4f = params["b4"] + be3 @ params["w4"]

    # ---- Lane-pad the 64-wide stage 2 to 128 (zero columns/rows) ------------
    D2 = params["w2"].shape[1]                 # 64
    D2P = _round_up(D2, 128)                   # 128
    pad2 = D2P - D2
    w1 = w1f.astype(jnp.bfloat16)
    w2 = jnp.pad(w2f, ((0, 0), (0, pad2))).astype(jnp.bfloat16)
    w3 = jnp.pad(w3f, ((0, pad2), (0, 0))).astype(jnp.bfloat16)
    w4 = w4f.astype(jnp.bfloat16)
    b1 = b1f.astype(jnp.float32)
    b2 = jnp.pad(b2f, ((0, 0), (0, pad2))).astype(jnp.float32)
    b3 = b3f.astype(jnp.float32)
    b4 = b4f.astype(jnp.float32)

    grid = (rows_p // row_tile,)

    def full_spec(arr):
        # Whole parameter resident in VMEM every grid step (constant index_map
        # => no re-DMA). Params are <0.5 MB bf16 here.
        shape = arr.shape
        return pl.BlockSpec(shape, lambda i, _n=len(shape): (0,) * _n)

    param_arrays = (w1, b1, w2, b2, w3, b3, w4, b4)
    in_specs = [pl.BlockSpec((row_tile, H), lambda i: (i, 0))]
    in_specs += [full_spec(a) for a in param_arrays]

    kernel = functools.partial(transformer_output_kernel,
                               d1=params["w1"].shape[1],   # 128
                               d2_real=D2,                 # 64
                               d3=params["w3"].shape[1])   # I

    out = pl.pallas_call(
        kernel,
        out_shape=jax.ShapeDtypeStruct((rows_p, I), out_dtype),
        grid=grid,
        in_specs=in_specs,
        out_specs=pl.BlockSpec((row_tile, I), lambda i: (i, 0)),
        compiler_params=pltpu.CompilerParams(
            dimension_semantics=("parallel",)
        ),
    )(x2d, *param_arrays)

    return out[:rows].reshape(B, S, I)


def init_params(key, hidden_size, intermediate_size):
    """Deterministic synthetic params (shapes follow the nn.Module __init__)."""
    ks = jax.random.split(key, 8)
    scale = 0.05

    def lin(k, din, dout):
        kw, kb = jax.random.split(k)
        w = scale * jax.random.normal(kw, (din, dout), jnp.float32)
        b = scale * jax.random.normal(kb, (1, dout), jnp.float32)
        return w, b

    w1, b1 = lin(ks[0], hidden_size, 128)
    w2, b2 = lin(ks[1], 128, 64)
    w3, b3 = lin(ks[2], 64, intermediate_size)
    w4, b4 = lin(ks[3], intermediate_size, intermediate_size)

    def ln(k, d):
        kg, kb = jax.random.split(k)
        g = 1.0 + 0.1 * jax.random.normal(kg, (1, d), jnp.float32)
        be = 0.1 * jax.random.normal(kb, (1, d), jnp.float32)
        return g, be

    g1, be1 = ln(ks[4], 128)
    g2, be2 = ln(ks[5], 64)
    g3, be3 = ln(ks[6], intermediate_size)

    return dict(
        w1=w1, b1=b1, g1=g1, be1=be1,
        w2=w2, b2=b2, g2=g2, be2=be2,
        w3=w3, b3=b3, g3=g3, be3=be3,
        w4=w4, b4=b4,
    )


def _reference(x, p):
    """Plain-JAX reference mirroring the torch forward (bf16 matmul operands,
    f32 accumulate, f32 LayerNorm with affine — i.e. un-folded)."""
    def mm(a, w):
        return jnp.dot(a.astype(jnp.bfloat16), w.astype(jnp.bfloat16),
                       preferred_element_type=jnp.float32)

    def ln(h, g, b):
        m = h.mean(-1, keepdims=True)
        v = ((h - m) ** 2).mean(-1, keepdims=True)
        return (h - m) * lax.rsqrt(v + LN_EPS) * g + b

    h = jnp.maximum(mm(x, p["w1"]) + p["b1"], 0.0)
    h = ln(h, p["g1"], p["be1"])
    h = jnp.maximum(mm(h, p["w2"]) + p["b2"], 0.0)
    h = ln(h, p["g2"], p["be2"])
    h = jnp.maximum(mm(h, p["w3"]) + p["b3"], 0.0)
    h = ln(h, p["g3"], p["be3"])
    h = jnp.maximum(mm(h, p["w4"]) + p["b4"], 0.0)
    return h


if __name__ == "__main__":
    hidden_size = 32
    intermediate_size = 256
    B, S = 2, 8  # rows = 16 -> tile clamps to 8, grid = (2,)

    key = jax.random.PRNGKey(0)
    k_x, k_p = jax.random.split(key)
    x = jax.random.normal(k_x, (B, S, hidden_size), jnp.float32)
    params = init_params(k_p, hidden_size, intermediate_size)

    out = jax.block_until_ready(transformer_output(x, params))

    ref = _reference(x.reshape(-1, hidden_size), params).reshape(out.shape)
    assert out.shape == (B, S, intermediate_size)
    assert jnp.allclose(out.astype(jnp.float32), ref, atol=5e-2, rtol=5e-2), \
        "mismatch vs reference"

    print("KERNEL_OK")
</pallas_src>

<mosaic_0001>
module attributes {stable_mosaic.version = 11 : i64} {
  func.func @transformer_output_kernel(%arg0: i32, %arg1: memref<8x32xbf16, #tpu.memory_space<vmem>>, %arg2: memref<32x128xbf16, #tpu.memory_space<vmem>>, %arg3: memref<1x128xf32, #tpu.memory_space<vmem>>, %arg4: memref<128x128xbf16, #tpu.memory_space<vmem>>, %arg5: memref<1x128xf32, #tpu.memory_space<vmem>>, %arg6: memref<128x256xbf16, #tpu.memory_space<vmem>>, %arg7: memref<1x256xf32, #tpu.memory_space<vmem>>, %arg8: memref<256x256xbf16, #tpu.memory_space<vmem>>, %arg9: memref<1x256xf32, #tpu.memory_space<vmem>>, %arg10: memref<8x256xbf16, #tpu.memory_space<vmem>>) attributes {dimension_semantics = [#tpu.dimension_semantics<parallel>], iteration_bounds = array<i64: 2>, scalar_prefetch = 0 : i64, scratch_operands = 0 : i64, tpu.core_type = #tpu.core_type<tc>, window_params = [{transform_indices = @transform_0, window_bounds = array<i64: 8, 32>}, {pipeline_mode = #tpu.pipeline_mode<synchronous>, transform_indices = @transform_1, window_bounds = array<i64: 32, 128>}, {pipeline_mode = #tpu.pipeline_mode<synchronous>, transform_indices = @transform_2, window_bounds = array<i64: 1, 128>}, {pipeline_mode = #tpu.pipeline_mode<synchronous>, transform_indices = @transform_3, window_bounds = array<i64: 128, 128>}, {pipeline_mode = #tpu.pipeline_mode<synchronous>, transform_indices = @transform_4, window_bounds = array<i64: 1, 128>}, {pipeline_mode = #tpu.pipeline_mode<synchronous>, transform_indices = @transform_5, window_bounds = array<i64: 128, 256>}, {pipeline_mode = #tpu.pipeline_mode<synchronous>, transform_indices = @transform_6, window_bounds = array<i64: 1, 256>}, {pipeline_mode = #tpu.pipeline_mode<synchronous>, transform_indices = @transform_7, window_bounds = array<i64: 256, 256>}, {pipeline_mode = #tpu.pipeline_mode<synchronous>, transform_indices = @transform_8, window_bounds = array<i64: 1, 256>}, {transform_indices = @transform_9, window_bounds = array<i64: 8, 256>}]} {
    %c0 = arith.constant 0 : index
    %c0_0 = arith.constant 0 : index
    %0 = vector.load %arg1[%c0, %c0_0] : memref<8x32xbf16, #tpu.memory_space<vmem>>, vector<8x32xbf16>
    %c0_1 = arith.constant 0 : index
    %c0_2 = arith.constant 0 : index
    %1 = vector.load %arg2[%c0_1, %c0_2] : memref<32x128xbf16, #tpu.memory_space<vmem>>, vector<32x128xbf16>
    %cst = arith.constant dense<0.000000e+00> : vector<8x128xf32>
    %2 = tpu.matmul %0, %1, %cst {dimension_numbers = #tpu.dot_dimension_numbers<[1], [0], [0], [1], [0, 0, 1, 1], [], []>} : vector<8x32xbf16>, vector<32x128xbf16>, vector<8x128xf32> -> vector<8x128xf32>
    %c0_3 = arith.constant 0 : index
    %c0_4 = arith.constant 0 : index
    %3 = vector.load %arg3[%c0_3, %c0_4] : memref<1x128xf32, #tpu.memory_space<vmem>>, vector<1x128xf32>
    %4 = vector.broadcast %3 : vector<1x128xf32> to vector<8x128xf32>
    %5 = arith.addf %2, %4 : vector<8x128xf32>
    %cst_5 = arith.constant 0.000000e+00 : f32
    %6 = vector.broadcast %cst_5 : f32 to vector<8x128xf32>
    %7 = arith.maximumf %5, %6 : vector<8x128xf32>
    %cst_6 = arith.constant dense<0.000000e+00> : vector<8xf32>
    %8 = vector.multi_reduction <add>, %7, %cst_6 [1] : vector<8x128xf32> to vector<8xf32>
    %9 = vector.shape_cast %8 : vector<8xf32> to vector<8x1xf32>
    %10 = arith.mulf %7, %7 : vector<8x128xf32>
    %cst_7 = arith.constant dense<0.000000e+00> : vector<8xf32>
    %11 = vector.multi_reduction <add>, %10, %cst_7 [1] : vector<8x128xf32> to vector<8xf32>
    %12 = vector.shape_cast %11 : vector<8xf32> to vector<8x1xf32>
    %cst_8 = arith.constant 7.812500e-03 : f32
    %13 = vector.broadcast %cst_8 : f32 to vector<8x1xf32>
    %14 = arith.mulf %9, %13 : vector<8x1xf32>
    %cst_9 = arith.constant 7.812500e-03 : f32
    %15 = vector.broadcast %cst_9 : f32 to vector<8x1xf32>
    %16 = arith.mulf %12, %15 : vector<8x1xf32>
    %17 = arith.mulf %14, %14 : vector<8x1xf32>
    %18 = arith.subf %16, %17 : vector<8x1xf32>
    %19 = vector.broadcast %14 : vector<8x1xf32> to vector<8x128xf32>
    %20 = arith.subf %7, %19 : vector<8x128xf32>
    %cst_10 = arith.constant 9.99999974E-6 : f32
    %21 = vector.broadcast %cst_10 : f32 to vector<8x1xf32>
    %22 = arith.addf %18, %21 : vector<8x1xf32>
    %23 = math.rsqrt %22 : vector<8x1xf32>
    %24 = vector.broadcast %23 : vector<8x1xf32> to vector<8x128xf32>
    %25 = arith.mulf %20, %24 : vector<8x128xf32>
    %26 = arith.truncf %25 : vector<8x128xf32> to vector<8x128xbf16>
    %c0_11 = arith.constant 0 : index
    %c0_12 = arith.constant 0 : index
    %27 = vector.load %arg4[%c0_11, %c0_12] : memref<128x128xbf16, #tpu.memory_space<vmem>>, vector<128x128xbf16>
    %cst_13 = arith.constant dense<0.000000e+00> : vector<8x128xf32>
    %28 = tpu.matmul %26, %27, %cst_13 {dimension_numbers = #tpu.dot_dimension_numbers<[1], [0], [0], [1], [0, 0, 1, 1], [], []>} : vector<8x128xbf16>, vector<128x128xbf16>, vector<8x128xf32> -> vector<8x128xf32>
    %c0_14 = arith.constant 0 : index
    %c0_15 = arith.constant 0 : index
    %29 = vector.load %arg5[%c0_14, %c0_15] : memref<1x128xf32, #tpu.memory_space<vmem>>, vector<1x128xf32>
    %30 = vector.broadcast %29 : vector<1x128xf32> to vector<8x128xf32>
    %31 = arith.addf %28, %30 : vector<8x128xf32>
    %cst_16 = arith.constant 0.000000e+00 : f32
    %32 = vector.broadcast %cst_16 : f32 to vector<8x128xf32>
    %33 = arith.maximumf %31, %32 : vector<8x128xf32>
    %cst_17 = arith.constant dense<0.000000e+00> : vector<8xf32>
    %34 = vector.multi_reduction <add>, %33, %cst_17 [1] : vector<8x128xf32> to vector<8xf32>
    %35 = vector.shape_cast %34 : vector<8xf32> to vector<8x1xf32>
    %36 = arith.mulf %33, %33 : vector<8x128xf32>
    %cst_18 = arith.constant dense<0.000000e+00> : vector<8xf32>
    %37 = vector.multi_reduction <add>, %36, %cst_18 [1] : vector<8x128xf32> to vector<8xf32>
    %38 = vector.shape_cast %37 : vector<8xf32> to vector<8x1xf32>
    %cst_19 = arith.constant 1.562500e-02 : f32
    %39 = vector.broadcast %cst_19 : f32 to vector<8x1xf32>
    %40 = arith.mulf %35, %39 : vector<8x1xf32>
    %cst_20 = arith.constant 1.562500e-02 : f32
    %41 = vector.broadcast %cst_20 : f32 to vector<8x1xf32>
    %42 = arith.mulf %38, %41 : vector<8x1xf32>
    %43 = arith.mulf %40, %40 : vector<8x1xf32>
    %44 = arith.subf %42, %43 : vector<8x1xf32>
    %45 = vector.broadcast %40 : vector<8x1xf32> to vector<8x128xf32>
    %46 = arith.subf %33, %45 : vector<8x128xf32>
    %cst_21 = arith.constant 9.99999974E-6 : f32
    %47 = vector.broadcast %cst_21 : f32 to vector<8x1xf32>
    %48 = arith.addf %44, %47 : vector<8x1xf32>
    %49 = math.rsqrt %48 : vector<8x1xf32>
    %50 = vector.broadcast %49 : vector<8x1xf32> to vector<8x128xf32>
    %51 = arith.mulf %46, %50 : vector<8x128xf32>
    %52 = arith.truncf %51 : vector<8x128xf32> to vector<8x128xbf16>
    %c0_22 = arith.constant 0 : index
    %c0_23 = arith.constant 0 : index
    %53 = vector.load %arg6[%c0_22, %c0_23] : memref<128x256xbf16, #tpu.memory_space<vmem>>, vector<128x256xbf16>
    %cst_24 = arith.constant dense<0.000000e+00> : vector<8x256xf32>
    %54 = tpu.matmul %52, %53, %cst_24 {dimension_numbers = #tpu.dot_dimension_numbers<[1], [0], [0], [1], [0, 0, 1, 1], [], []>} : vector<8x128xbf16>, vector<128x256xbf16>, vector<8x256xf32> -> vector<8x256xf32>
    %c0_25 = arith.constant 0 : index
    %c0_26 = arith.constant 0 : index
    %55 = vector.load %arg7[%c0_25, %c0_26] : memref<1x256xf32, #tpu.memory_space<vmem>>, vector<1x256xf32>
    %56 = vector.broadcast %55 : vector<1x256xf32> to vector<8x256xf32>
    %57 = arith.addf %54, %56 : vector<8x256xf32>
    %cst_27 = arith.constant 0.000000e+00 : f32
    %58 = vector.broadcast %cst_27 : f32 to vector<8x256xf32>
    %59 = arith.maximumf %57, %58 : vector<8x256xf32>
    %cst_28 = arith.constant dense<0.000000e+00> : vector<8xf32>
    %60 = vector.multi_reduction <add>, %59, %cst_28 [1] : vector<8x256xf32> to vector<8xf32>
    %61 = vector.shape_cast %60 : vector<8xf32> to vector<8x1xf32>
    %62 = arith.mulf %59, %59 : vector<8x256xf32>
    %cst_29 = arith.constant dense<0.000000e+00> : vector<8xf32>
    %63 = vector.multi_reduction <add>, %62, %cst_29 [1] : vector<8x256xf32> to vector<8xf32>
    %64 = vector.shape_cast %63 : vector<8xf32> to vector<8x1xf32>
    %cst_30 = arith.constant 3.906250e-03 : f32
    %65 = vector.broadcast %cst_30 : f32 to vector<8x1xf32>
    %66 = arith.mulf %61, %65 : vector<8x1xf32>
    %cst_31 = arith.constant 3.906250e-03 : f32
    %67 = vector.broadcast %cst_31 : f32 to vector<8x1xf32>
    %68 = arith.mulf %64, %67 : vector<8x1xf32>
    %69 = arith.mulf %66, %66 : vector<8x1xf32>
    %70 = arith.subf %68, %69 : vector<8x1xf32>
    %71 = vector.broadcast %66 : vector<8x1xf32> to vector<8x256xf32>
    %72 = arith.subf %59, %71 : vector<8x256xf32>
    %cst_32 = arith.constant 9.99999974E-6 : f32
    %73 = vector.broadcast %cst_32 : f32 to vector<8x1xf32>
    %74 = arith.addf %70, %73 : vector<8x1xf32>
    %75 = math.rsqrt %74 : vector<8x1xf32>
    %76 = vector.broadcast %75 : vector<8x1xf32> to vector<8x256xf32>
    %77 = arith.mulf %72, %76 : vector<8x256xf32>
    %78 = arith.truncf %77 : vector<8x256xf32> to vector<8x256xbf16>
    %c0_33 = arith.constant 0 : index
    %c0_34 = arith.constant 0 : index
    %79 = vector.load %arg8[%c0_33, %c0_34] : memref<256x256xbf16, #tpu.memory_space<vmem>>, vector<256x256xbf16>
    %cst_35 = arith.constant dense<0.000000e+00> : vector<8x256xf32>
    %80 = tpu.matmul %78, %79, %cst_35 {dimension_numbers = #tpu.dot_dimension_numbers<[1], [0], [0], [1], [0, 0, 1, 1], [], []>} : vector<8x256xbf16>, vector<256x256xbf16>, vector<8x256xf32> -> vector<8x256xf32>
    %c0_36 = arith.constant 0 : index
    %c0_37 = arith.constant 0 : index
    %81 = vector.load %arg9[%c0_36, %c0_37] : memref<1x256xf32, #tpu.memory_space<vmem>>, vector<1x256xf32>
    %82 = vector.broadcast %81 : vector<1x256xf32> to vector<8x256xf32>
    %83 = arith.addf %80, %82 : vector<8x256xf32>
    %cst_38 = arith.constant 0.000000e+00 : f32
    %84 = vector.broadcast %cst_38 : f32 to vector<8x256xf32>
    %85 = arith.maximumf %83, %84 : vector<8x256xf32>
    %86 = arith.truncf %85 : vector<8x256xf32> to vector<8x256xbf16>
    %c0_39 = arith.constant 0 : index
    %c0_40 = arith.constant 0 : index
    %87 = vector.load %arg10[%c0_39, %c0_40] : memref<8x256xbf16, #tpu.memory_space<vmem>>, vector<8x256xbf16>
    tpu.vector_store %arg10[%c0_39, %c0_40], %86 {strides = array<i32>} : memref<8x256xbf16, #tpu.memory_space<vmem>>, vector<8x256xbf16>,
    return
  }
  func.func @transform_0(%arg0: i32) -> (i32, i32) {
    %c0_i32 = arith.constant 0 : i32
    %c0_i32_0 = arith.constant 0 : i32
    return %arg0, %c0_i32 : i32, i32
  }
  func.func @transform_1(%arg0: i32) -> (i32, i32) {
    %c0_i32 = arith.constant 0 : i32
    %c0_i32_0 = arith.constant 0 : i32
    %c0_i32_1 = arith.constant 0 : i32
    return %c0_i32, %c0_i32_0 : i32, i32
  }
  func.func @transform_2(%arg0: i32) -> (i32, i32) {
    %c0_i32 = arith.constant 0 : i32
    %c0_i32_0 = arith.constant 0 : i32
    %c0_i32_1 = arith.constant 0 : i32
    return %c0_i32, %c0_i32_0 : i32, i32
  }
  func.func @transform_3(%arg0: i32) -> (i32, i32) {
    %c0_i32 = arith.constant 0 : i32
    %c0_i32_0 = arith.constant 0 : i32
    %c0_i32_1 = arith.constant 0 : i32
    return %c0_i32, %c0_i32_0 : i32, i32
  }
  func.func @transform_4(%arg0: i32) -> (i32, i32) {
    %c0_i32 = arith.constant 0 : i32
    %c0_i32_0 = arith.constant 0 : i32
    %c0_i32_1 = arith.constant 0 : i32
    return %c0_i32, %c0_i32_0 : i32, i32
  }
  func.func @transform_5(%arg0: i32) -> (i32, i32) {
    %c0_i32 = arith.constant 0 : i32
    %c0_i32_0 = arith.constant 0 : i32
    %c0_i32_1 = arith.constant 0 : i32
    return %c0_i32, %c0_i32_0 : i32, i32
  }
  func.func @transform_6(%arg0: i32) -> (i32, i32) {
    %c0_i32 = arith.constant 0 : i32
    %c0_i32_0 = arith.constant 0 : i32
    %c0_i32_1 = arith.constant 0 : i32
    return %c0_i32, %c0_i32_0 : i32, i32
  }
  func.func @transform_7(%arg0: i32) -> (i32, i32) {
    %c0_i32 = arith.constant 0 : i32
    %c0_i32_0 = arith.constant 0 : i32
    %c0_i32_1 = arith.constant 0 : i32
    return %c0_i32, %c0_i32_0 : i32, i32
  }
  func.func @transform_8(%arg0: i32) -> (i32, i32) {
    %c0_i32 = arith.constant 0 : i32
    %c0_i32_0 = arith.constant 0 : i32
    %c0_i32_1 = arith.constant 0 : i32
    return %c0_i32, %c0_i32_0 : i32, i32
  }
  func.func @transform_9(%arg0: i32) -> (i32, i32) {
    %c0_i32 = arith.constant 0 : i32
    %c0_i32_0 = arith.constant 0 : i32
    return %arg0, %c0_i32 : i32, i32
  }
}

</mosaic_0001>

<llo_original>
// kernel: tpu_custom_call.1
$region0: #{tpu_custom_call.1}
  #allocation0 [shape = 'u32[]', space=smem, size = 0x4, offset = 0x4, fixed_abs, tag = 'smem constant byte address 0x4 - core index']
  #allocation1 [shape = 'u32[144,128]{1,0:T(1,128)}', space=vmem, size = 0x12000, scoped, tag = 'internal scratch']
  %s0 = inlined_call_operand.hbm [shape: bf16[16,32], index: 0, kind: input, shape index: {}]
  %s1 = inlined_call_operand.hbm [shape: bf16[32,128], index: 1, kind: input, shape index: {}]
  %s2 = inlined_call_operand.vmem [shape: f32[1,128], index: 2, kind: input, shape index: {}]
  %s3 = inlined_call_operand.hbm [shape: bf16[128,128], index: 3, kind: input, shape index: {}]
  %s4 = inlined_call_operand.vmem [shape: f32[1,128], index: 4, kind: input, shape index: {}]
  %s5 = inlined_call_operand.hbm [shape: bf16[128,256], index: 5, kind: input, shape index: {}]
  %s6 = inlined_call_operand.vmem [shape: f32[1,256], index: 6, kind: input, shape index: {}]
  %s7 = inlined_call_operand.hbm [shape: bf16[256,256], index: 7, kind: input, shape index: {}]
  %s8 = inlined_call_operand.vmem [shape: f32[1,256], index: 8, kind: input, shape index: {}]
  %s9 = inlined_call_operand.hbm [shape: bf16[16,256], index: 9, kind: output, shape index: {}]
  %s10 = sld [smem:[#allocation0]]
  $region89: #{tpu_custom_call.1} parent=0
    _
  %s12 = ssub.s32 1, %s10
  %s13 = scalar_select 0, %s12, %s10
  $region1: #{tpu_custom_call.1} parent=0
    #allocation2 [shape = 'u8[4096]{0}', space=vmem, size = 0x1000, scoped, tag = 'input window, operand 0']
    #allocation3 [shape = 's32[2]{0}', space=sflag, size = 0x8, scoped, tag = 'scoped memory for tpu_custom_call.1']
    #allocation4 [shape = 's32[2]{0}', space=sflag, size = 0x8, scoped, tag = 'scoped memory for tpu_custom_call.1']
    #allocation5 [shape = 'u8[8192]{0}', space=vmem, size = 0x2000, scoped, tag = 'input window, operand 1, single buffered']
    #allocation6 [shape = 's32[1]{0}', space=sflag, size = 0x4, scoped, tag = 'scoped memory for tpu_custom_call.1']
    #allocation7 [shape = 'u8[32768]{0}', space=vmem, size = 0x8000, scoped, tag = 'input window, operand 3, single buffered']
    #allocation8 [shape = 'u8[65536]{0}', space=vmem, size = 0x10000, scoped, tag = 'input window, operand 5, single buffered']
    #allocation9 [shape = 's32[1]{0}', space=sflag, size = 0x4, scoped, tag = 'scoped memory for tpu_custom_call.1']
    #allocation10 [shape = 'u8[131072]{0}', space=vmem, size = 0x20000, scoped, tag = 'input window, operand 7, single buffered']
    #allocation11 [shape = 'u8[8192]{0}', space=vmem, size = 0x2000, scoped, tag = 'output window, operand 0']
    %14 = vsyncpa [#allocation3], 0
    %s15 = scalar_lea.sflag [#allocation3], 1
    %16 = vsyncpa %s15, 0
    %17 = vsyncpa [#allocation6], 0
    %18 = vsyncpa [#allocation9], 0
    %19 = vsyncpa [#allocation4], 0
    %s20 = scalar_lea.sflag [#allocation4], 1
    %21 = vsyncpa %s20, 0
    loop: start=0, step=1, limit=4
    $region2: #{tpu_custom_call.1} parent=1 // loop_pre_header
      _
    $region3: #{tpu_custom_call.1} parent=1 // loop_header
      %s23 = sphi 0, %s27
      %p24 = scmp.ge.s32.totalorder %s23, 4
      %s33 = sphi 0, %s35
      %s36 = sphi 0, %s33
      %s37 = sphi 0, %s36
      %s53 = sphi 0, %s37
      %s57 = sphi 0, %s57
      %s59 = sphi 0, %s57
      %s60 = sphi 0, %s59
      %s74 = sphi 0, %s60
      %s78 = sphi 0, %s78
      %s80 = sphi 0, %s78
      %s81 = sphi 0, %s80
      %s95 = sphi 0, %s81
      %s99 = sphi 0, %s99
      %s101 = sphi 0, %s99
      %s102 = sphi 0, %s101
      %s116 = sphi 0, %s102
      %s120 = sphi 0, %s120
      %s122 = sphi 0, %s120
      %s123 = sphi 0, %s122
      %s137 = sphi 0, %s123
      %s141 = sphi 0, %s141
      %s143 = sphi 0, %s141
      %s144 = sphi 0, %s143
      %s158 = sphi 0, %s144
      %s162 = sphi 0, %s162
      %s164 = sphi 0, %s162
      %s165 = sphi 0, %s164
      %s179 = sphi 0, %s165
      %s183 = sphi 0, %s183
      %s185 = sphi 0, %s183
      %s186 = sphi 0, %s185
      %s200 = sphi 0, %s186
      %s204 = sphi 0, %s204
      %s206 = sphi 0, %s204
      %s207 = sphi 0, %s206
      %s221 = sphi 0, %s207
      %s227 = sphi 0, %s229
      %s230 = sphi 0, %s227
      %s231 = sphi 0, %s230
      %s247 = sphi 0, %s231
    $region4: #{tpu_custom_call.1} parent=1 // loop_header_branch
      %26 = sbr.rel (%p24) target = $region8
    $region5: #{tpu_custom_call.1} parent=1 // loop_body
      %s28 = ssub.s32 %s23, 1
      %s29 = ssub.s32 %s23, 2
      %s30 = sadd.s32 %s23, 1
      %s31 = ssub.s32 %s23, %s30
      %p32 = scmp.eq.s32.totalorder %s31, 0
      %s34 = sadd.s32 %s33, 1
      %s35 = scalar_select %p32, %s33, %s34
      %p38 = pneg %p32
      %p39 = scmp.eq.s32.totalorder %s23, 1
      %p40 = por %p38, %p39
      %p41 = scmp.ne.s32.totalorder %s33, %s36
      %p42 = scmp.eq.s32.totalorder %s23, 0
      %p43 = por %p41, %p42
      %p44 = scmp.ne.s32.totalorder %s33, %s36
      %p45 = scmp.eq.s32.totalorder %s28, 1
      %p46 = por %p44, %p45
      %p47 = scmp.ne.s32.totalorder %s36, %s37
      %p48 = scmp.eq.s32.totalorder %s28, 0
      %p49 = por %p47, %p48
      %p50 = scmp.ne.s32.totalorder %s36, %s37
      %p51 = scmp.eq.s32.totalorder %s29, 1
      %p52 = por %p50, %p51
      %p54 = scmp.ne.s32.totalorder %s37, %s53
      %p55 = scmp.eq.s32.totalorder %s29, 0
      %p56 = por %p54, %p55
      %s58 = sadd.s32 %s57, 1
      %p61 = scmp.eq.s32.totalorder %s23, 1
      %p62 = scmp.ne.s32.totalorder %s57, %s59
      %p63 = scmp.eq.s32.totalorder %s23, 0
      %p64 = por %p62, %p63
      %p65 = scmp.ne.s32.totalorder %s57, %s59
      %p66 = scmp.eq.s32.totalorder %s28, 1
      %p67 = por %p65, %p66
      %p68 = scmp.ne.s32.totalorder %s59, %s60
      %p69 = scmp.eq.s32.totalorder %s28, 0
      %p70 = por %p68, %p69
      %p71 = scmp.ne.s32.totalorder %s59, %s60
      %p72 = scmp.eq.s32.totalorder %s29, 1
      %p73 = por %p71, %p72
      %p75 = scmp.ne.s32.totalorder %s60, %s74
      %p76 = scmp.eq.s32.totalorder %s29, 0
      %p77 = por %p75, %p76
      %s79 = sadd.s32 %s78, 1
      %p82 = scmp.eq.s32.totalorder %s23, 1
      %p83 = scmp.ne.s32.totalorder %s78, %s80
      %p84 = scmp.eq.s32.totalorder %s23, 0
      %p85 = por %p83, %p84
      %p86 = scmp.ne.s32.totalorder %s78, %s80
      %p87 = scmp.eq.s32.totalorder %s28, 1
      %p88 = por %p86, %p87
      %p89 = scmp.ne.s32.totalorder %s80, %s81
      %p90 = scmp.eq.s32.totalorder %s28, 0
      %p91 = por %p89, %p90
      %p92 = scmp.ne.s32.totalorder %s80, %s81
      %p93 = scmp.eq.s32.totalorder %s29, 1
      %p94 = por %p92, %p93
      %p96 = scmp.ne.s32.totalorder %s81, %s95
      %p97 = scmp.eq.s32.totalorder %s29, 0
      %p98 = por %p96, %p97
      %s100 = sadd.s32 %s99, 1
      %p103 = scmp.eq.s32.totalorder %s23, 1
      %p104 = scmp.ne.s32.totalorder %s99, %s101
      %p105 = scmp.eq.s32.totalorder %s23, 0
      %p106 = por %p104, %p105
      %p107 = scmp.ne.s32.totalorder %s99, %s101
      %p108 = scmp.eq.s32.totalorder %s28, 1
      %p109 = por %p107, %p108
      %p110 = scmp.ne.s32.totalorder %s101, %s102
      %p111 = scmp.eq.s32.totalorder %s28, 0
      %p112 = por %p110, %p111
      %p113 = scmp.ne.s32.totalorder %s101, %s102
      %p114 = scmp.eq.s32.totalorder %s29, 1
      %p115 = por %p113, %p114
      %p117 = scmp.ne.s32.totalorder %s102, %s116
      %p118 = scmp.eq.s32.totalorder %s29, 0
      %p119 = por %p117, %p118
      %s121 = sadd.s32 %s120, 1
      %p124 = scmp.eq.s32.totalorder %s23, 1
      %p125 = scmp.ne.s32.totalorder %s120, %s122
      %p126 = scmp.eq.s32.totalorder %s23, 0
      %p127 = por %p125, %p126
      %p128 = scmp.ne.s32.totalorder %s120, %s122
      %p129 = scmp.eq.s32.totalorder %s28, 1
      %p130 = por %p128, %p129
      %p131 = scmp.ne.s32.totalorder %s122, %s123
      %p132 = scmp.eq.s32.totalorder %s28, 0
      %p133 = por %p131, %p132
      %p134 = scmp.ne.s32.totalorder %s122, %s123
      %p135 = scmp.eq.s32.totalorder %s29, 1
      %p136 = por %p134, %p135
      %p138 = scmp.ne.s32.totalorder %s123, %s137
      %p139 = scmp.eq.s32.totalorder %s29, 0
      %p140 = por %p138, %p139
      %s142 = sadd.s32 %s141, 1
      %p145 = scmp.eq.s32.totalorder %s23, 1
      %p146 = scmp.ne.s32.totalorder %s141, %s143
      %p147 = scmp.eq.s32.totalorder %s23, 0
      %p148 = por %p146, %p147
      %p149 = scmp.ne.s32.totalorder %s141, %s143
      %p150 = scmp.eq.s32.totalorder %s28, 1
      %p151 = por %p149, %p150
      %p152 = scmp.ne.s32.totalorder %s143, %s144
      %p153 = scmp.eq.s32.totalorder %s28, 0
      %p154 = por %p152, %p153
      %p155 = scmp.ne.s32.totalorder %s143, %s144
      %p156 = scmp.eq.s32.totalorder %s29, 1
      %p157 = por %p155, %p156
      %p159 = scmp.ne.s32.totalorder %s144, %s158
      %p160 = scmp.eq.s32.totalorder %s29, 0
      %p161 = por %p159, %p160
      %s163 = sadd.s32 %s162, 1
      %p166 = scmp.eq.s32.totalorder %s23, 1
      %p167 = scmp.ne.s32.totalorder %s162, %s164
      %p168 = scmp.eq.s32.totalorder %s23, 0
      %p169 = por %p167, %p168
      %p170 = scmp.ne.s32.totalorder %s162, %s164
      %p171 = scmp.eq.s32.totalorder %s28, 1
      %p172 = por %p170, %p171
      %p173 = scmp.ne.s32.totalorder %s164, %s165
      %p174 = scmp.eq.s32.totalorder %s28, 0
      %p175 = por %p173, %p174
      %p176 = scmp.ne.s32.totalorder %s164, %s165
      %p177 = scmp.eq.s32.totalorder %s29, 1
      %p178 = por %p176, %p177
      %p180 = scmp.ne.s32.totalorder %s165, %s179
      %p181 = scmp.eq.s32.totalorder %s29, 0
      %p182 = por %p180, %p181
      %s184 = sadd.s32 %s183, 1
      %p187 = scmp.eq.s32.totalorder %s23, 1
      %p188 = scmp.ne.s32.totalorder %s183, %s185
      %p189 = scmp.eq.s32.totalorder %s23, 0
      %p190 = por %p188, %p189
      %p191 = scmp.ne.s32.totalorder %s183, %s185
      %p192 = scmp.eq.s32.totalorder %s28, 1
      %p193 = por %p191, %p192
      %p194 = scmp.ne.s32.totalorder %s185, %s186
      %p195 = scmp.eq.s32.totalorder %s28, 0
      %p196 = por %p194, %p195
      %p197 = scmp.ne.s32.totalorder %s185, %s186
      %p198 = scmp.eq.s32.totalorder %s29, 1
      %p199 = por %p197, %p198
      %p201 = scmp.ne.s32.totalorder %s186, %s200
      %p202 = scmp.eq.s32.totalorder %s29, 0
      %p203 = por %p201, %p202
      %s205 = sadd.s32 %s204, 1
      %p208 = scmp.eq.s32.totalorder %s23, 1
      %p209 = scmp.ne.s32.totalorder %s204, %s206
      %p210 = scmp.eq.s32.totalorder %s23, 0
      %p211 = por %p209, %p210
      %p212 = scmp.ne.s32.totalorder %s204, %s206
      %p213 = scmp.eq.s32.totalorder %s28, 1
      %p214 = por %p212, %p213
      %p215 = scmp.ne.s32.totalorder %s206, %s207
      %p216 = scmp.eq.s32.totalorder %s28, 0
      %p217 = por %p215, %p216
      %p218 = scmp.ne.s32.totalorder %s206, %s207
      %p219 = scmp.eq.s32.totalorder %s29, 1
      %p220 = por %p218, %p219
      %p222 = scmp.ne.s32.totalorder %s207, %s221
      %p223 = scmp.eq.s32.totalorder %s29, 0
      %p224 = por %p222, %p223
      %s225 = ssub.s32 %s23, %s30
      %p226 = scmp.eq.s32.totalorder %s225, 0
      %s228 = sadd.s32 %s227, 1
      %s229 = scalar_select %p226, %s227, %s228
      %p232 = pneg %p226
      %p233 = scmp.eq.s32.totalorder %s23, 1
      %p234 = por %p232, %p233
      %p235 = scmp.ne.s32.totalorder %s227, %s230
      %p236 = scmp.eq.s32.totalorder %s23, 0
      %p237 = por %p235, %p236
      %p238 = scmp.ne.s32.totalorder %s227, %s230
      %p239 = scmp.eq.s32.totalorder %s28, 1
      %p240 = por %p238, %p239
      %p241 = scmp.ne.s32.totalorder %s230, %s231
      %p242 = scmp.eq.s32.totalorder %s28, 0
      %p243 = por %p241, %p242
      %p244 = scmp.ne.s32.totalorder %s230, %s231
      %p245 = scmp.eq.s32.totalorder %s29, 1
      %p246 = por %p244, %p245
      %p248 = scmp.ne.s32.totalorder %s231, %s247
      %p249 = scmp.eq.s32.totalorder %s29, 0
      %p250 = por %p248, %p249
      %p251 = scmp.le.s32.totalorder 1, %s23
      %p252 = scmp.lt.s32.totalorder %s23, 3
      %p253 = pnand %p251, %p252
      %p254 = pneg %p253
      // Predicated region
      $region9: #{tpu_custom_call.1} parent=5 // pred_check
        _
      $region10: #{tpu_custom_call.1} parent=5 // pred_check_branch
        %256 = sbr.rel (%p253) target = $region12
      $region11: #{tpu_custom_call.1} parent=5 // pred_region
        %s257 = ssub.s32 %s23, 1
        // Predicated region
        $region13: #{tpu_custom_call.1} parent=11 // pred_check
          %p258 = pneg %p70
        $region14: #{tpu_custom_call.1} parent=11 // pred_check_branch
          %260 = sbr.rel (%p258) target = $region16
        $region15: #{tpu_custom_call.1} parent=11 // pred_region
          %s262 = ssub.s32 256, 256
          %263 = vsyncadd [#allocation6], %s262
          %s264 = sshll.u32 [#allocation5], 4
          %s265 = int_to_ptr.vmem [resolvable:$true] %s264
          %270 = dma.hbm_to_vmem [thread:$0]  %s1, 256, %s265, [#allocation6], 64, 64, 4
        $region16: #{tpu_custom_call.1} parent=11 // pred_fallthru
          _
        // Predicated region
        $region17: #{tpu_custom_call.1} parent=11 // pred_check
          %p271 = pneg %p91
        $region18: #{tpu_custom_call.1} parent=11 // pred_check_branch
          %273 = sbr.rel (%p271) target = $region20
        $region19: #{tpu_custom_call.1} parent=11 // pred_region
          _
        $region20: #{tpu_custom_call.1} parent=11 // pred_fallthru
          _
        // Predicated region
        $region21: #{tpu_custom_call.1} parent=11 // pred_check
          %p274 = pneg %p112
        $region22: #{tpu_custom_call.1} parent=11 // pred_check_branch
          %276 = sbr.rel (%p274) target = $region24
        $region23: #{tpu_custom_call.1} parent=11 // pred_region
          %s278 = ssub.s32 1024, 1024
          %279 = vsyncadd [#allocation6], %s278
          %s280 = sshll.u32 [#allocation7], 4
          %s281 = int_to_ptr.vmem [resolvable:$true] %s280
          %286 = dma.hbm_to_vmem [thread:$0]  %s3, 1024, %s281, [#allocation6], 64, 64, 4
        $region24: #{tpu_custom_call.1} parent=11 // pred_fallthru
          _
        // Predicated region
        $region25: #{tpu_custom_call.1} parent=11 // pred_check
          %p287 = pneg %p133
        $region26: #{tpu_custom_call.1} parent=11 // pred_check_branch
          %289 = sbr.rel (%p287) target = $region28
        $region27: #{tpu_custom_call.1} parent=11 // pred_region
          _
        $region28: #{tpu_custom_call.1} parent=11 // pred_fallthru
          _
        // Predicated region
        $region29: #{tpu_custom_call.1} parent=11 // pred_check
          %p290 = pneg %p154
        $region30: #{tpu_custom_call.1} parent=11 // pred_check_branch
          %292 = sbr.rel (%p290) target = $region32
        $region31: #{tpu_custom_call.1} parent=11 // pred_region
          %s294 = ssub.s32 2048, 2048
          %295 = vsyncadd [#allocation9], %s294
          %s296 = sshll.u32 [#allocation8], 4
          %s297 = int_to_ptr.vmem [resolvable:$true] %s296
          %302 = dma.hbm_to_vmem [thread:$0]  %s5, 2048, %s297, [#allocation9], 128, 128, 8
        $region32: #{tpu_custom_call.1} parent=11 // pred_fallthru
          _
        // Predicated region
        $region33: #{tpu_custom_call.1} parent=11 // pred_check
          %p303 = pneg %p175
        $region34: #{tpu_custom_call.1} parent=11 // pred_check_branch
          %305 = sbr.rel (%p303) target = $region36
        $region35: #{tpu_custom_call.1} parent=11 // pred_region
          _
        $region36: #{tpu_custom_call.1} parent=11 // pred_fallthru
          _
        // Predicated region
        $region37: #{tpu_custom_call.1} parent=11 // pred_check
          %p306 = pneg %p196
        $region38: #{tpu_custom_call.1} parent=11 // pred_check_branch
          %308 = sbr.rel (%p306) target = $region40
        $region39: #{tpu_custom_call.1} parent=11 // pred_region
          %s310 = ssub.s32 4096, 4096
          %311 = vsyncadd [#allocation9], %s310
          %s312 = sshll.u32 [#allocation10], 4
          %s313 = int_to_ptr.vmem [resolvable:$true] %s312
          %318 = dma.hbm_to_vmem [thread:$0]  %s7, 4096, %s313, [#allocation9], 128, 128, 8
        $region40: #{tpu_custom_call.1} parent=11 // pred_fallthru
          _
        // Predicated region
        $region41: #{tpu_custom_call.1} parent=11 // pred_check
          %p319 = pneg %p217
        $region42: #{tpu_custom_call.1} parent=11 // pred_check_branch
          %321 = sbr.rel (%p319) target = $region44
        $region43: #{tpu_custom_call.1} parent=11 // pred_region
          _
        $region44: #{tpu_custom_call.1} parent=11 // pred_fallthru
          _
      $region12: #{tpu_custom_call.1} parent=5 // pred_fallthru
        _
      %p322 = scmp.lt.s32.totalorder %s23, 2
      // Predicated region
      $region45: #{tpu_custom_call.1} parent=5 // pred_check
        %p323 = pneg %p322
      $region46: #{tpu_custom_call.1} parent=5 // pred_check_branch
        %325 = sbr.rel (%p323) target = $region48
      $region47: #{tpu_custom_call.1} parent=5 // pred_region
        // Predicated region
        $region49: #{tpu_custom_call.1} parent=47 // pred_check
          %p326 = pneg %p43
        $region50: #{tpu_custom_call.1} parent=47 // pred_check_branch
          %328 = sbr.rel (%p326) target = $region52
        $region51: #{tpu_custom_call.1} parent=47 // pred_region
          %s329 = sand.u32 %s33, 1
          %s330 = scalar_lea.sflag [#allocation3], %s329
          %s331 = sand.u32 %s33, 1
          %s332 = smul.addr %s331, 4
          %s333 = scalar_lea.vmem [#allocation2], %s332
          %s335 = ssub.s32 64, 64
          %336 = vsyncadd %s330, %s335
          %s337 = smul.addr %s23, 64
          %s338 = scalar_lea.hbm %s0, %s337
          %s340 = sshll.u32 %s333, 4
          %s341 = int_to_ptr.vmem [resolvable:$true] %s340
          %343 = dma.hbm_to_vmem [thread:$0]  %s338, 64, %s341, %s330
        $region52: #{tpu_custom_call.1} parent=47 // pred_fallthru
          _
      $region48: #{tpu_custom_call.1} parent=5 // pred_fallthru
        _
      %p344 = scmp.le.s32.totalorder 1, %s23
      %p345 = scmp.lt.s32.totalorder %s23, 3
      %p346 = pnand %p344, %p345
      %p347 = pneg %p346
      // Predicated region
      $region53: #{tpu_custom_call.1} parent=5 // pred_check
        _
      $region54: #{tpu_custom_call.1} parent=5 // pred_check_branch
        %349 = sbr.rel (%p346) target = $region56
      $region55: #{tpu_custom_call.1} parent=5 // pred_region
        %s350 = ssub.s32 %s23, 1
        %s351 = sand.u32 %s36, 1
        %s352 = scalar_lea.sflag [#allocation3], %s351
        %s353 = sand.u32 %s36, 1
        %s354 = smul.addr %s353, 4
        %s355 = scalar_lea.vmem [#allocation2], %s354
        // Predicated region
        $region57: #{tpu_custom_call.1} parent=55 // pred_check
          %p356 = pneg %p49
        $region58: #{tpu_custom_call.1} parent=55 // pred_check_branch
          %358 = sbr.rel (%p356) target = $region60
        $region59: #{tpu_custom_call.1} parent=55 // pred_region
          %359 = dma.done %s352, 64
        $region60: #{tpu_custom_call.1} parent=55 // pred_fallthru
          _
        // Predicated region
        $region61: #{tpu_custom_call.1} parent=55 // pred_check
          %p360 = pneg %p70
        $region62: #{tpu_custom_call.1} parent=55 // pred_check_branch
          %362 = sbr.rel (%p360) target = $region64
        $region63: #{tpu_custom_call.1} parent=55 // pred_region
          %363 = dma.done [#allocation6], 256
        $region64: #{tpu_custom_call.1} parent=55 // pred_fallthru
          _
        // Predicated region
        $region65: #{tpu_custom_call.1} parent=55 // pred_check
          %p364 = pneg %p112
        $region66: #{tpu_custom_call.1} parent=55 // pred_check_branch
          %366 = sbr.rel (%p364) target = $region68
        $region67: #{tpu_custom_call.1} parent=55 // pred_region
          %367 = dma.done [#allocation6], 1024
        $region68: #{tpu_custom_call.1} parent=55 // pred_fallthru
          _
        // Predicated region
        $region69: #{tpu_custom_call.1} parent=55 // pred_check
          %p368 = pneg %p154
        $region70: #{tpu_custom_call.1} parent=55 // pred_check_branch
          %370 = sbr.rel (%p368) target = $region72
        $region71: #{tpu_custom_call.1} parent=55 // pred_region
          %371 = dma.done [#allocation9], 2048
        $region72: #{tpu_custom_call.1} parent=55 // pred_fallthru
          _
        // Predicated region
        $region73: #{tpu_custom_call.1} parent=55 // pred_check
          %p372 = pneg %p196
        $region74: #{tpu_custom_call.1} parent=55 // pred_check_branch
          %374 = sbr.rel (%p372) target = $region76
        $region75: #{tpu_custom_call.1} parent=55 // pred_region
          %375 = dma.done [#allocation9], 4096
        $region76: #{tpu_custom_call.1} parent=55 // pred_fallthru
          _
        %s376 = sand.u32 %s36, 1
        %s377 = scalar_lea.sflag [#allocation3], %s376
        %s378 = sand.u32 %s36, 1
        %s379 = smul.addr %s378, 4
        %s380 = scalar_lea.vmem [#allocation2], %s379
        %p381 = pneg %p49
        %p382 = pneg %p46
        %p383 = pneg %p70
        %p384 = pneg %p67
        %p385 = pneg %p91
        %p386 = pneg %p88
        %p387 = pneg %p112
        %p388 = pneg %p109
        %p389 = pneg %p133
        %p390 = pneg %p130
        %p391 = pneg %p154
        %p392 = pneg %p151
        %p393 = pneg %p175
        %p394 = pneg %p172
        %p395 = pneg %p196
        %p396 = pneg %p193
        %p397 = pneg %p217
        %p398 = pneg %p214
        %p399 = pneg %p243
        %p400 = pneg %p240
        %s401 = sand.u32 %s230, 1
        %s402 = scalar_lea.sflag [#allocation4], %s401
        %s403 = sand.u32 %s230, 1
        %s404 = smul.addr %s403, 8
        %s405 = scalar_lea.vmem [#allocation11], %s404
        %v407 = vld [vmem:[%s355] sm:$0xf]
        %v408 = vld [vmem:[#allocation5] sm:$0xf]
        %v409 = vld [vmem:[#allocation5 + $0x4] sm:$0xf]
        %v410 = vld [vmem:[#allocation5 + $0x8] sm:$0xf]
        %v411 = vld [vmem:[#allocation5 + $0xc] sm:$0xf]
        %v412 = vld [vmem:[%s2] sm:$0x1]
        %v414 = vlaneseq
        %v415 = vshrl.u32 %v414, 7
        %v416 = vsub.s32 0, %v415
        %v417 = vrot.slane %v412, %v416
        %v423 = vunpack.c.l.b16 %v408
        %v424 = vunpack.c.l.b16 %v409
        %v425 = vunpack.c.l.b16 %v410
        %v426 = vunpack.c.l.b16 %v411
        %v427 = vpack.c.b16 %v424, %v423
        %v428 = vpack.c.b16 %v426, %v425
        %vm431 = vcmask 261120
        %v433 = vsel %vm431, %v407, 0
        %435 = vmatprep.subr.bf16.mxu0 0
        %436 = vmatpush1.bf16.msra.mxu0 %v427
        %437 = vmatprep.subr.bf16.mxu0 0
        %438 = vmatpush1.bf16.msra.mxu0 %v428
        %439 = vmatprep.subr.bf16.mxu0 0
        %440 = vmatpush1.bf16.msra.mxu0 0
        %441 = vmatprep.subr.bf16.mxu0 0
        %442 = vmatpush1.bf16.msra.mxu0 0
        %443 = vmatprep.subr.bf16.mxu0 0
        %444 = vmatpush1.bf16.msra.mxu0 0
        %445 = vmatprep.subr.bf16.mxu0 0
        %446 = vmatpush1.bf16.msra.mxu0 0
        %447 = vmatprep.subr.bf16.mxu0 0
        %448 = vmatpush1.bf16.msra.mxu0 0
        %449 = vmatprep.subr.bf16.mxu0 0
        %450 = vmatpush1.bf16.msra.mxu0 0
        %451 = vmatprep.subr.bf16.mxu0 0
        %452 = vmatpush1.bf16.msra.mxu0 0
        %453 = vmatprep.subr.bf16.mxu0 0
        %454 = vmatpush1.bf16.msra.mxu0 0
        %455 = vmatprep.subr.bf16.mxu0 0
        %456 = vmatpush1.bf16.msra.mxu0 0
        %457 = vmatprep.subr.bf16.mxu0 0
        %458 = vmatpush1.bf16.msra.mxu0 0
        %459 = vmatprep.subr.bf16.mxu0 0
        %460 = vmatpush1.bf16.msra.mxu0 0
        %461 = vmatprep.subr.bf16.mxu0 0
        %462 = vmatpush1.bf16.msra.mxu0 0
        %463 = vmatprep.subr.bf16.mxu0 0
        %464 = vmatpush1.bf16.msra.mxu0 0
        %465 = vmatprep.subr.bf16.mxu0 0
        %466 = vmatpush1.bf16.msra.mxu0 0
        %467 = vmatprep.mubr.bf16.mxu0 0
        %468 = vmatmul.mubr.bf16.gmra.mrb[0].mxu0 %v433
        %v469 = vpop.f32.mrb[0].mxu0
        %v470 = vadd.f32 %v417, %v469
        %v471 = vpop.f32.mrb[0].mxu0
        %v472 = vpop.f32.mrb[0].mxu0
        %v473 = vpop.f32.mrb[0].mxu0
        %474 = vdwg.mxu0
        %v475 = vmax.f32 %v470, 0.0
        %476 = vadd.xlane.f32.xlu0 %v475
        %v477 = vpop.xlane.xlu0 %476
        %v478 = vmul.f32 %v475, %v475
        %479 = vadd.xlane.f32.xlu0 %v478
        %v480 = vpop.xlane.xlu0 %479
        %v481 = vmul.f32 %v477, 0.0078125
        %v482 = vmul.f32 %v480, 0.0078125
        %v483 = vmul.f32 %v481, %v481
        %v484 = vsub.f32 %v482, %v483
        %v485 = vsub.f32 %v475, %v481
        %v486 = vadd.f32 %v484, 1e-05
        %v487 = vrsqrt.pop %v486
        %v488 = vmul.f32 %v485, %v487
        %v489 = vpack.c.bf16 %v488, %v488
        %v490 = vld [vmem:[#allocation7] sm:$0xf]
        %v491 = vld [vmem:[#allocation7 + $0x4] sm:$0xf]
        %v492 = vld [vmem:[#allocation7 + $0x8] sm:$0xf]
        %v493 = vld [vmem:[#allocation7 + $0xc] sm:$0xf]
        %v494 = vld [vmem:[#allocation7 + $0x10] sm:$0xf]
        %v495 = vld [vmem:[#allocation7 + $0x14] sm:$0xf]
        %v496 = vld [vmem:[#allocation7 + $0x18] sm:$0xf]
        %v497 = vld [vmem:[#allocation7 + $0x1c] sm:$0xf]
        %v498 = vld [vmem:[#allocation7 + $0x20] sm:$0xf]
        %v499 = vld [vmem:[#allocation7 + $0x24] sm:$0xf]
        %v500 = vld [vmem:[#allocation7 + $0x28] sm:$0xf]
        %v501 = vld [vmem:[#allocation7 + $0x2c] sm:$0xf]
        %v502 = vld [vmem:[#allocation7 + $0x30] sm:$0xf]
        %v503 = vld [vmem:[#allocation7 + $0x34] sm:$0xf]
        %v504 = vld [vmem:[#allocation7 + $0x38] sm:$0xf]
        %v505 = vld [vmem:[#allocation7 + $0x3c] sm:$0xf]
        %v506 = vld [vmem:[%s4] sm:$0x1]
        %v508 = vlaneseq
        %v509 = vshrl.u32 %v508, 7
        %v510 = vsub.s32 0, %v509
        %v511 = vrot.slane %v506, %v510
        %v529 = vunpack.c.l.b16 %v490
        %v530 = vunpack.c.l.b16 %v491
        %v531 = vunpack.c.l.b16 %v492
        %v532 = vunpack.c.l.b16 %v493
        %v533 = vunpack.c.l.b16 %v494
        %v534 = vunpack.c.l.b16 %v495
        %v535 = vunpack.c.l.b16 %v496
        %v536 = vunpack.c.l.b16 %v497
        %v537 = vunpack.c.l.b16 %v498
        %v538 = vunpack.c.l.b16 %v499
        %v539 = vunpack.c.l.b16 %v500
        %v540 = vunpack.c.l.b16 %v501
        %v541 = vunpack.c.l.b16 %v502
        %v542 = vunpack.c.l.b16 %v503
        %v543 = vunpack.c.l.b16 %v504
        %v544 = vunpack.c.l.b16 %v505
        %v545 = vpack.c.b16 %v530, %v529
        %v546 = vpack.c.b16 %v532, %v531
        %v547 = vpack.c.b16 %v534, %v533
        %v548 = vpack.c.b16 %v536, %v535
        %v549 = vpack.c.b16 %v538, %v537
        %v550 = vpack.c.b16 %v540, %v539
        %v551 = vpack.c.b16 %v542, %v541
        %v552 = vpack.c.b16 %v544, %v543
        %561 = vmatprep.subr.bf16.mxu0 0
        %562 = vmatpush1.bf16.msra.mxu0 %v545
        %563 = vmatprep.subr.bf16.mxu0 0
        %564 = vmatpush1.bf16.msra.mxu0 %v546
        %565 = vmatprep.subr.bf16.mxu0 0
        %566 = vmatpush1.bf16.msra.mxu0 %v547
        %567 = vmatprep.subr.bf16.mxu0 0
        %568 = vmatpush1.bf16.msra.mxu0 %v548
        %569 = vmatprep.subr.bf16.mxu0 0
        %570 = vmatpush1.bf16.msra.mxu0 %v549
        %571 = vmatprep.subr.bf16.mxu0 0
        %572 = vmatpush1.bf16.msra.mxu0 %v550
        %573 = vmatprep.subr.bf16.mxu0 0
        %574 = vmatpush1.bf16.msra.mxu0 %v551
        %575 = vmatprep.subr.bf16.mxu0 0
        %576 = vmatpush1.bf16.msra.mxu0 %v552
        %577 = vmatprep.subr.bf16.mxu0 0
        %578 = vmatpush1.bf16.msra.mxu0 0
        %579 = vmatprep.subr.bf16.mxu0 0
        %580 = vmatpush1.bf16.msra.mxu0 0
        %581 = vmatprep.subr.bf16.mxu0 0
        %582 = vmatpush1.bf16.msra.mxu0 0
        %583 = vmatprep.subr.bf16.mxu0 0
        %584 = vmatpush1.bf16.msra.mxu0 0
        %585 = vmatprep.subr.bf16.mxu0 0
        %586 = vmatpush1.bf16.msra.mxu0 0
        %587 = vmatprep.subr.bf16.mxu0 0
        %588 = vmatpush1.bf16.msra.mxu0 0
        %589 = vmatprep.subr.bf16.mxu0 0
        %590 = vmatpush1.bf16.msra.mxu0 0
        %591 = vmatprep.subr.bf16.mxu0 0
        %592 = vmatpush1.bf16.msra.mxu0 0
        %593 = vmatprep.mubr.bf16.mxu0 0
        %594 = vmatmul.mubr.bf16.gmra.mrb[0].mxu0 %v489
        %v595 = vpop.f32.mrb[0].mxu0
        %v596 = vadd.f32 %v511, %v595
        %v597 = vpop.f32.mrb[0].mxu0
        %v598 = vpop.f32.mrb[0].mxu0
        %v599 = vpop.f32.mrb[0].mxu0
        %600 = vdwg.mxu0
        %v601 = vmax.f32 %v596, 0.0
        %602 = vadd.xlane.f32.xlu0 %v601
        %v603 = vpop.xlane.xlu0 %602
        %v604 = vmul.f32 %v601, %v601
        %605 = vadd.xlane.f32.xlu0 %v604
        %v606 = vpop.xlane.xlu0 %605
        %v607 = vmul.f32 %v603, 0.015625
        %v608 = vmul.f32 %v606, 0.015625
        %v609 = vmul.f32 %v607, %v607
        %v610 = vsub.f32 %v608, %v609
        %v611 = vsub.f32 %v601, %v607
        %v612 = vadd.f32 %v610, 1e-05
        %v613 = vrsqrt.pop %v612
        %v614 = vmul.f32 %v611, %v613
        %v615 = vpack.c.bf16 %v614, %v614
        %v616 = vld [vmem:[#allocation8] sm:$0xff]
        %v617 = vld [vmem:[#allocation8 + $0x8] sm:$0xff]
        %v618 = vld [vmem:[#allocation8 + $0x10] sm:$0xff]
        %v619 = vld [vmem:[#allocation8 + $0x18] sm:$0xff]
        %v620 = vld [vmem:[#allocation8 + $0x20] sm:$0xff]
        %v621 = vld [vmem:[#allocation8 + $0x28] sm:$0xff]
        %v622 = vld [vmem:[#allocation8 + $0x30] sm:$0xff]
        %v623 = vld [vmem:[#allocation8 + $0x38] sm:$0xff]
        %v624 = vld [vmem:[#allocation8 + $0x40] sm:$0xff]
        %v625 = vld [vmem:[#allocation8 + $0x48] sm:$0xff]
        %v626 = vld [vmem:[#allocation8 + $0x50] sm:$0xff]
        %v627 = vld [vmem:[#allocation8 + $0x58] sm:$0xff]
        %v628 = vld [vmem:[#allocation8 + $0x60] sm:$0xff]
        %v629 = vld [vmem:[#allocation8 + $0x68] sm:$0xff]
        %v630 = vld [vmem:[#allocation8 + $0x70] sm:$0xff]
        %v631 = vld [vmem:[#allocation8 + $0x78] sm:$0xff]
        %v632 = vld [vmem:[%s6] sm:$0x3]
        %v634 = vlaneseq
        %v635 = vshrl.u32 %v634, 7
        %v636 = vsub.s32 0, %v635
        %v637 = vrot.slane %v632, %v636
        %v638 = vlaneseq
        %v639 = vshrl.u32 %v638, 7
        %v640 = vsub.s32 1, %v639
        %v641 = vrot.slane %v632, %v640
        %v660 = vunpack.c.l.b16 %v616
        %v661 = vunpack.c.h.b16 %v616
        %v662 = vunpack.c.l.b16 %v617
        %v663 = vunpack.c.h.b16 %v617
        %v664 = vunpack.c.l.b16 %v618
        %v665 = vunpack.c.h.b16 %v618
        %v666 = vunpack.c.l.b16 %v619
        %v667 = vunpack.c.h.b16 %v619
        %v668 = vunpack.c.l.b16 %v620
        %v669 = vunpack.c.h.b16 %v620
        %v670 = vunpack.c.l.b16 %v621
        %v671 = vunpack.c.h.b16 %v621
        %v672 = vunpack.c.l.b16 %v622
        %v673 = vunpack.c.h.b16 %v622
        %v674 = vunpack.c.l.b16 %v623
        %v675 = vunpack.c.h.b16 %v623
        %v676 = vunpack.c.l.b16 %v624
        %v677 = vunpack.c.h.b16 %v624
        %v678 = vunpack.c.l.b16 %v625
        %v679 = vunpack.c.h.b16 %v625
        %v680 = vunpack.c.l.b16 %v626
        %v681 = vunpack.c.h.b16 %v626
        %v682 = vunpack.c.l.b16 %v627
        %v683 = vunpack.c.h.b16 %v627
        %v684 = vunpack.c.l.b16 %v628
        %v685 = vunpack.c.h.b16 %v628
        %v686 = vunpack.c.l.b16 %v629
        %v687 = vunpack.c.h.b16 %v629
        %v688 = vunpack.c.l.b16 %v630
        %v689 = vunpack.c.h.b16 %v630
        %v690 = vunpack.c.l.b16 %v631
        %v691 = vunpack.c.h.b16 %v631
        %v692 = vpack.c.b16 %v662, %v660
        %v693 = vpack.c.b16 %v663, %v661
        %v694 = vpack.c.b16 %v666, %v664
        %v695 = vpack.c.b16 %v667, %v665
        %v696 = vpack.c.b16 %v670, %v668
        %v697 = vpack.c.b16 %v671, %v669
        %v698 = vpack.c.b16 %v674, %v672
        %v699 = vpack.c.b16 %v675, %v673
        %v700 = vpack.c.b16 %v678, %v676
        %v701 = vpack.c.b16 %v679, %v677
        %v702 = vpack.c.b16 %v682, %v680
        %v703 = vpack.c.b16 %v683, %v681
        %v704 = vpack.c.b16 %v686, %v684
        %v705 = vpack.c.b16 %v687, %v685
        %v706 = vpack.c.b16 %v690, %v688
        %v707 = vpack.c.b16 %v691, %v689
        %724 = vmatprep.subr.bf16.mxu0 %v693
        %725 = vmatpush1.bf16.msra.mxu0 %v692
        %726 = vmatprep.subr.bf16.mxu0 %v695
        %727 = vmatpush1.bf16.msra.mxu0 %v694
        %728 = vmatprep.subr.bf16.mxu0 %v697
        %729 = vmatpush1.bf16.msra.mxu0 %v696
        %730 = vmatprep.subr.bf16.mxu0 %v699
        %731 = vmatpush1.bf16.msra.mxu0 %v698
        %732 = vmatprep.subr.bf16.mxu0 %v701
        %733 = vmatpush1.bf16.msra.mxu0 %v700
        %734 = vmatprep.subr.bf16.mxu0 %v703
        %735 = vmatpush1.bf16.msra.mxu0 %v702
        %736 = vmatprep.subr.bf16.mxu0 %v705
        %737 = vmatpush1.bf16.msra.mxu0 %v704
        %738 = vmatprep.subr.bf16.mxu0 %v707
        %739 = vmatpush1.bf16.msra.mxu0 %v706
        %740 = vmatprep.subr.bf16.mxu0 0
        %741 = vmatpush1.bf16.msra.mxu0 0
        %742 = vmatprep.subr.bf16.mxu0 0
        %743 = vmatpush1.bf16.msra.mxu0 0
        %744 = vmatprep.subr.bf16.mxu0 0
        %745 = vmatpush1.bf16.msra.mxu0 0
        %746 = vmatprep.subr.bf16.mxu0 0
        %747 = vmatpush1.bf16.msra.mxu0 0
        %748 = vmatprep.subr.bf16.mxu0 0
        %749 = vmatpush1.bf16.msra.mxu0 0
        %750 = vmatprep.subr.bf16.mxu0 0
        %751 = vmatpush1.bf16.msra.mxu0 0
        %752 = vmatprep.subr.bf16.mxu0 0
        %753 = vmatpush1.bf16.msra.mxu0 0
        %754 = vmatprep.subr.bf16.mxu0 0
        %755 = vmatpush1.bf16.msra.mxu0 0
        %756 = vmatprep.mubr.bf16.mxu0 0
        %757 = vmatmul.mubr.bf16.gmra.mrb[0].mxu0 %v615
        %v758 = vpop.f32.mrb[0].mxu0
        %v759 = vadd.f32 %v637, %v758
        %v760 = vpop.f32.mrb[0].mxu0
        %v761 = vadd.f32 %v641, %v760
        %v762 = vpop.f32.mrb[0].mxu0
        %v763 = vpop.f32.mrb[0].mxu0
        %764 = vdwg.mxu0
        %v765 = vmax.f32 %v759, 0.0
        %v766 = vmax.f32 %v761, 0.0
        %v767 = vadd.f32 %v765, %v766
        %768 = vadd.xlane.f32.xlu0 %v767
        %v769 = vpop.xlane.xlu0 %768
        %v770 = vmul.f32 %v765, %v765
        %v771 = vmul.f32 %v766, %v766
        %v772 = vadd.f32 %v770, %v771
        %773 = vadd.xlane.f32.xlu0 %v772
        %v774 = vpop.xlane.xlu0 %773
        %v775 = vmul.f32 %v769, 0.00390625
        %v776 = vmul.f32 %v774, 0.00390625
        %v777 = vmul.f32 %v775, %v775
        %v778 = vsub.f32 %v776, %v777
        %v779 = vsub.f32 %v765, %v775
        %v780 = vsub.f32 %v766, %v775
        %v781 = vadd.f32 %v778, 1e-05
        %v782 = vrsqrt.pop %v781
        %v783 = vmul.f32 %v779, %v782
        %v784 = vmul.f32 %v780, %v782
        %v785 = vpack.c.bf16 %v783, %v783
        %v786 = vpack.c.bf16 %v784, %v784
        %v787 = vld [vmem:[#allocation10] sm:$0xff]
        %v788 = vld [vmem:[#allocation10 + $0x8] sm:$0xff]
        %v789 = vld [vmem:[#allocation10 + $0x10] sm:$0xff]
        %v790 = vld [vmem:[#allocation10 + $0x18] sm:$0xff]
        %v791 = vld [vmem:[#allocation10 + $0x20] sm:$0xff]
        %v792 = vld [vmem:[#allocation10 + $0x28] sm:$0xff]
        %v793 = vld [vmem:[#allocation10 + $0x30] sm:$0xff]
        %v794 = vld [vmem:[#allocation10 + $0x38] sm:$0xff]
        %v795 = vld [vmem:[#allocation10 + $0x40] sm:$0xff]
        %v796 = vld [vmem:[#allocation10 + $0x48] sm:$0xff]
        %v797 = vld [vmem:[#allocation10 + $0x50] sm:$0xff]
        %v798 = vld [vmem:[#allocation10 + $0x58] sm:$0xff]
        %v799 = vld [vmem:[#allocation10 + $0x60] sm:$0xff]
        %v800 = vld [vmem:[#allocation10 + $0x68] sm:$0xff]
        %v801 = vld [vmem:[#allocation10 + $0x70] sm:$0xff]
        %v802 = vld [vmem:[#allocation10 + $0x78] sm:$0xff]
        %v803 = vld [vmem:[#allocation10 + $0x80] sm:$0xff]
        %v804 = vld [vmem:[#allocation10 + $0x88] sm:$0xff]
        %v805 = vld [vmem:[#allocation10 + $0x90] sm:$0xff]
        %v806 = vld [vmem:[#allocation10 + $0x98] sm:$0xff]
        %v807 = vld [vmem:[#allocation10 + $0xa0] sm:$0xff]
        %v808 = vld [vmem:[#allocation10 + $0xa8] sm:$0xff]
        %v809 = vld [vmem:[#allocation10 + $0xb0] sm:$0xff]
        %v810 = vld [vmem:[#allocation10 + $0xb8] sm:$0xff]
        %v811 = vld [vmem:[#allocation10 + $0xc0] sm:$0xff]
        %v812 = vld [vmem:[#allocation10 + $0xc8] sm:$0xff]
        %v813 = vld [vmem:[#allocation10 + $0xd0] sm:$0xff]
        %v814 = vld [vmem:[#allocation10 + $0xd8] sm:$0xff]
        %v815 = vld [vmem:[#allocation10 + $0xe0] sm:$0xff]
        %v816 = vld [vmem:[#allocation10 + $0xe8] sm:$0xff]
        %v817 = vld [vmem:[#allocation10 + $0xf0] sm:$0xff]
        %v818 = vld [vmem:[#allocation10 + $0xf8] sm:$0xff]
        %v819 = vld [vmem:[%s8] sm:$0x3]
        %v821 = vlaneseq
        %v822 = vshrl.u32 %v821, 7
        %v823 = vsub.s32 0, %v822
        %v824 = vrot.slane %v819, %v823
        %v825 = vlaneseq
        %v826 = vshrl.u32 %v825, 7
        %v827 = vsub.s32 1, %v826
        %v828 = vrot.slane %v819, %v827
        %v863 = vunpack.c.l.b16 %v787
        %v864 = vunpack.c.h.b16 %v787
        %v865 = vunpack.c.l.b16 %v788
        %v866 = vunpack.c.h.b16 %v788
        %v867 = vunpack.c.l.b16 %v789
        %v868 = vunpack.c.h.b16 %v789
        %v869 = vunpack.c.l.b16 %v790
        %v870 = vunpack.c.h.b16 %v790
        %v871 = vunpack.c.l.b16 %v791
        %v872 = vunpack.c.h.b16 %v791
        %v873 = vunpack.c.l.b16 %v792
        %v874 = vunpack.c.h.b16 %v792
        %v875 = vunpack.c.l.b16 %v793
        %v876 = vunpack.c.h.b16 %v793
        %v877 = vunpack.c.l.b16 %v794
        %v878 = vunpack.c.h.b16 %v794
        %v879 = vunpack.c.l.b16 %v795
        %v880 = vunpack.c.h.b16 %v795
        %v881 = vunpack.c.l.b16 %v796
        %v882 = vunpack.c.h.b16 %v796
        %v883 = vunpack.c.l.b16 %v797
        %v884 = vunpack.c.h.b16 %v797
        %v885 = vunpack.c.l.b16 %v798
        %v886 = vunpack.c.h.b16 %v798
        %v887 = vunpack.c.l.b16 %v799
        %v888 = vunpack.c.h.b16 %v799
        %v889 = vunpack.c.l.b16 %v800
        %v890 = vunpack.c.h.b16 %v800
        %v891 = vunpack.c.l.b16 %v801
        %v892 = vunpack.c.h.b16 %v801
        %v893 = vunpack.c.l.b16 %v802
        %v894 = vunpack.c.h.b16 %v802
        %v895 = vunpack.c.l.b16 %v803
        %v896 = vunpack.c.h.b16 %v803
        %v897 = vunpack.c.l.b16 %v804
        %v898 = vunpack.c.h.b16 %v804
        %v899 = vunpack.c.l.b16 %v805
        %v900 = vunpack.c.h.b16 %v805
        %v901 = vunpack.c.l.b16 %v806
        %v902 = vunpack.c.h.b16 %v806
        %v903 = vunpack.c.l.b16 %v807
        %v904 = vunpack.c.h.b16 %v807
        %v905 = vunpack.c.l.b16 %v808
        %v906 = vunpack.c.h.b16 %v808
        %v907 = vunpack.c.l.b16 %v809
        %v908 = vunpack.c.h.b16 %v809
        %v909 = vunpack.c.l.b16 %v810
        %v910 = vunpack.c.h.b16 %v810
        %v911 = vunpack.c.l.b16 %v811
        %v912 = vunpack.c.h.b16 %v811
        %v913 = vunpack.c.l.b16 %v812
        %v914 = vunpack.c.h.b16 %v812
        %v915 = vunpack.c.l.b16 %v813
        %v916 = vunpack.c.h.b16 %v813
        %v917 = vunpack.c.l.b16 %v814
        %v918 = vunpack.c.h.b16 %v814
        %v919 = vunpack.c.l.b16 %v815
        %v920 = vunpack.c.h.b16 %v815
        %v921 = vunpack.c.l.b16 %v816
        %v922 = vunpack.c.h.b16 %v816
        %v923 = vunpack.c.l.b16 %v817
        %v924 = vunpack.c.h.b16 %v817
        %v925 = vunpack.c.l.b16 %v818
        %v926 = vunpack.c.h.b16 %v818
        %v927 = vpack.c.b16 %v865, %v863
        %v928 = vpack.c.b16 %v866, %v864
        %v929 = vpack.c.b16 %v869, %v867
        %v930 = vpack.c.b16 %v870, %v868
        %v931 = vpack.c.b16 %v873, %v871
        %v932 = vpack.c.b16 %v874, %v872
        %v933 = vpack.c.b16 %v877, %v875
        %v934 = vpack.c.b16 %v878, %v876
        %v935 = vpack.c.b16 %v881, %v879
        %v936 = vpack.c.b16 %v882, %v880
        %v937 = vpack.c.b16 %v885, %v883
        %v938 = vpack.c.b16 %v886, %v884
        %v939 = vpack.c.b16 %v889, %v887
        %v940 = vpack.c.b16 %v890, %v888
        %v941 = vpack.c.b16 %v893, %v891
        %v942 = vpack.c.b16 %v894, %v892
        %v943 = vpack.c.b16 %v897, %v895
        %v944 = vpack.c.b16 %v898, %v896
        %v945 = vpack.c.b16 %v901, %v899
        %v946 = vpack.c.b16 %v902, %v900
        %v947 = vpack.c.b16 %v905, %v903
        %v948 = vpack.c.b16 %v906, %v904
        %v949 = vpack.c.b16 %v909, %v907
        %v950 = vpack.c.b16 %v910, %v908
        %v951 = vpack.c.b16 %v913, %v911
        %v952 = vpack.c.b16 %v914, %v912
        %v953 = vpack.c.b16 %v917, %v915
        %v954 = vpack.c.b16 %v918, %v916
        %v955 = vpack.c.b16 %v921, %v919
        %v956 = vpack.c.b16 %v922, %v920
        %v957 = vpack.c.b16 %v925, %v923
        %v958 = vpack.c.b16 %v926, %v924
        %991 = vmatprep.subr.bf16.mxu0 %v928
        %992 = vmatpush1.bf16.msra.mxu0 %v927
        %993 = vmatprep.subr.bf16.mxu0 %v930
        %994 = vmatpush1.bf16.msra.mxu0 %v929
        %995 = vmatprep.subr.bf16.mxu0 %v932
        %996 = vmatpush1.bf16.msra.mxu0 %v931
        %997 = vmatprep.subr.bf16.mxu0 %v934
        %998 = vmatpush1.bf16.msra.mxu0 %v933
        %999 = vmatprep.subr.bf16.mxu0 %v936
        %1000 = vmatpush1.bf16.msra.mxu0 %v935
        %1001 = vmatprep.subr.bf16.mxu0 %v938
        %1002 = vmatpush1.bf16.msra.mxu0 %v937
        %1003 = vmatprep.subr.bf16.mxu0 %v940
        %1004 = vmatpush1.bf16.msra.mxu0 %v939
        %1005 = vmatprep.subr.bf16.mxu0 %v942
        %1006 = vmatpush1.bf16.msra.mxu0 %v941
        %1007 = vmatprep.subr.bf16.mxu0 %v944
        %1008 = vmatpush1.bf16.msra.mxu0 %v943
        %1009 = vmatprep.subr.bf16.mxu0 %v946
        %1010 = vmatpush1.bf16.msra.mxu0 %v945
        %1011 = vmatprep.subr.bf16.mxu0 %v948
        %1012 = vmatpush1.bf16.msra.mxu0 %v947
        %1013 = vmatprep.subr.bf16.mxu0 %v950
        %1014 = vmatpush1.bf16.msra.mxu0 %v949
        %1015 = vmatprep.subr.bf16.mxu0 %v952
        %1016 = vmatpush1.bf16.msra.mxu0 %v951
        %1017 = vmatprep.subr.bf16.mxu0 %v954
        %1018 = vmatpush1.bf16.msra.mxu0 %v953
        %1019 = vmatprep.subr.bf16.mxu0 %v956
        %1020 = vmatpush1.bf16.msra.mxu0 %v955
        %1021 = vmatprep.subr.bf16.mxu0 %v958
        %1022 = vmatpush1.bf16.msra.mxu0 %v957
        %1023 = vmatprep.mubr.bf16.mxu0 %v786
        %1024 = vmatmul.mubr.bf16.gmra.mrb[0].mxu0 %v785
        %v1025 = vpop.f32.mrb[0].mxu0
        %v1026 = vadd.f32 %v824, %v1025
        %v1027 = vpop.f32.mrb[0].mxu0
        %v1028 = vadd.f32 %v828, %v1027
        %v1029 = vpop.f32.mrb[0].mxu0
        %v1030 = vpop.f32.mrb[0].mxu0
        %1031 = vdwg.mxu0
        %v1032 = vmax.f32 %v1026, 0.0
        %v1033 = vmax.f32 %v1028, 0.0
        %v1034 = vpack.c.bf16 %v1032, %v1032
        %v1035 = vpack.c.bf16 %v1033, %v1033
        %v1038 = vunpack.c.l.b16 %v1034
        %v1039 = vunpack.c.l.b16 %v1035
        %v1040 = vpack.c.b16 %v1039, %v1038
        %1042 = vst [vmem:[%s405] sm:$0xff] %v1040
        %s1043 = sand.u32 %s230, 1
        %s1044 = scalar_lea.sflag [#allocation4], %s1043
        %s1045 = sand.u32 %s230, 1
        %s1046 = smul.addr %s1045, 8
        %s1047 = scalar_lea.vmem [#allocation11], %s1046
        // Predicated region
        $region77: #{tpu_custom_call.1} parent=55 // pred_check
          %p1048 = pneg %p240
        $region78: #{tpu_custom_call.1} parent=55 // pred_check_branch
          %1050 = sbr.rel (%p1048) target = $region80
        $region79: #{tpu_custom_call.1} parent=55 // pred_region
          %s1052 = ssub.s32 128, 128
          %1053 = vsyncadd %s1044, %s1052
          %s1054 = smul.addr %s28, 2
          %s1055 = smul.addr %s1054, 64
          %s1056 = scalar_lea.hbm %s9, %s1055
          %s1058 = sshll.u32 %s1047, 4
          %s1059 = int_to_ptr.vmem [resolvable:$true] %s1058
          %1061 = dma.vmem_to_hbm [thread:$0]  %s1059, 128, %s1056, %s1044
        $region80: #{tpu_custom_call.1} parent=55 // pred_fallthru
          _
      $region56: #{tpu_custom_call.1} parent=5 // pred_fallthru
        _
      %p1062 = scmp.le.s32.totalorder 2, %s23
      // Predicated region
      $region81: #{tpu_custom_call.1} parent=5 // pred_check
        %p1063 = pneg %p1062
      $region82: #{tpu_custom_call.1} parent=5 // pred_check_branch
        %1065 = sbr.rel (%p1063) target = $region84
      $region83: #{tpu_custom_call.1} parent=5 // pred_region
        %s1066 = ssub.s32 %s23, 2
        // Predicated region
        $region85: #{tpu_custom_call.1} parent=83 // pred_check
          %p1067 = pneg %p246
        $region86: #{tpu_custom_call.1} parent=83 // pred_check_branch
          %1069 = sbr.rel (%p1067) target = $region88
        $region87: #{tpu_custom_call.1} parent=83 // pred_region
          %s1070 = sand.u32 %s231, 1
          %s1071 = scalar_lea.sflag [#allocation4], %s1070
          %s1072 = sand.u32 %s231, 1
          %s1073 = smul.addr %s1072, 8
          %s1074 = scalar_lea.vmem [#allocation11], %s1073
          %1075 = dma.done %s1071, 128
        $region88: #{tpu_custom_call.1} parent=83 // pred_fallthru
          _
      $region84: #{tpu_custom_call.1} parent=5 // pred_fallthru
        _
    $region6: #{tpu_custom_call.1} parent=1 // loop_footer
      %s27 = sadd.s32 1, %s23
    $region7: #{tpu_custom_call.1} parent=1 // loop_footer_branch
      %22 = sbr.rel target = $region3
    $region8: #{tpu_custom_call.1} parent=1 // loop_exit
      _
    %1076 = vsyncpa [#allocation3], 1
    %s1077 = scalar_lea.sflag [#allocation3], 1
    %1078 = vsyncpa %s1077, 1
    %1079 = vsyncpa [#allocation6], 1
    %1080 = vsyncpa [#allocation9], 1
    %1081 = vsyncpa [#allocation4], 1
    %s1082 = scalar_lea.sflag [#allocation4], 1
    %1083 = vsyncpa %s1082, 1

</llo_original>
